<compile_context>
chip_gen: v5e
topology: v5e:2x2
jax: 0.10.0
libtpu: 0.0.40
codegen_flags: <defaults>
</compile_context>

<pallas_src>
import functools
import math

import jax
import jax.numpy as jnp
from jax.experimental import pallas as pl
from jax.experimental.pallas import tpu as pltpu


def _round_up(x, m):
    return ((x + m - 1) // m) * m


def _sublane_pack(dtype):
    # Sublanes packed per vreg: 8 for 4-byte, 16 for 2-byte, 32 for 1-byte dtypes.
    return max(8, 32 // jnp.dtype(dtype).itemsize)


def _compute_dtype(emb_dtype):
    """f32 math for f32 inputs; bf16-native math on v6e/v7x, f32 upcast on v5e."""
    if jnp.dtype(emb_dtype) != jnp.dtype(jnp.bfloat16):
        return jnp.float32
    try:
        kind = jax.devices()[0].device_kind.lower()
    except Exception:
        kind = ""
    if "v5" in kind:          # v5e VPU has no bf16 ALU
        return jnp.float32
    return jnp.bfloat16


def _pe_add_kernel(emb_ref, pe_ref, out_ref, *, scale, batch, dim, compute_dtype):
    # emb_ref/out_ref: (ts, batch*dim); pe_ref: (ts, dim).
    # PE is broadcast over batch along the lane axis via static per-batch slices:
    # when dim % 128 == 0 each slice is whole vregs, so loads/stores stay dense
    # and no tile-sized temporary is materialized.
    p = pe_ref[...].astype(compute_dtype)
    for b in range(batch):
        sl = slice(b * dim, (b + 1) * dim)
        e = emb_ref[:, sl].astype(compute_dtype)
        out_ref[:, sl] = (e * scale + p).astype(out_ref.dtype)


def make_pe_table(dim, max_len=5000, dtype=jnp.float32):
    """Sinusoidal PE buffer, identical to the PyTorch __init__ (even dim only)."""
    if dim % 2 != 0:
        raise ValueError(
            "Cannot use sin/cos positional encoding with odd dim (got dim={:d})".format(dim))
    position = jnp.arange(0, max_len, dtype=jnp.float32)[:, None]          # (max_len, 1)
    div_term = jnp.exp(jnp.arange(0, dim, 2, dtype=jnp.float32)
                       * -(math.log(10000.0) / dim))                       # (dim/2,)
    pe = jnp.zeros((max_len, dim), dtype=jnp.float32)
    pe = pe.at[:, 0::2].set(jnp.sin(position * div_term))
    pe = pe.at[:, 1::2].set(jnp.cos(position * div_term))
    return pe[:, None, :].astype(dtype)                                    # (max_len, 1, dim)


def positional_encoding_forward(emb, pe, step=None, *,
                                vmem_budget_bytes=24 * 1024 * 1024,
                                donate_emb=False,
                                use_pallas=None):
    """emb: (seq_len, batch, dim); pe: (max_len, 1, dim).
    Returns emb * sqrt(dim) + pe[:seq_len] (or + pe[step]); dropout = identity.
    use_pallas: None = auto (Pallas for seq path when >= 1 MiB), True/False = force.
    The step/decode path always uses plain JAX (custom-call overhead > kernel time)."""
    seq_len, batch, dim = emb.shape
    assert pe.shape[-1] == dim, "pe/emb dim mismatch"
    scale = float(math.sqrt(dim))
    cd = _compute_dtype(emb.dtype)

    # --- tiny / stepwise decode fast path: plain JAX (fuses into neighbours) ---
    total_bytes = emb.size * jnp.dtype(emb.dtype).itemsize
    if step is not None or use_pallas is False or (
            use_pallas is None and total_bytes < (1 << 20)):
        if step is None:
            pe_sel = jax.lax.slice_in_dim(pe, 0, seq_len, axis=0)          # (seq, 1, dim)
        else:
            pe_sel = jax.lax.dynamic_slice_in_dim(pe, step, 1, axis=0)     # (1, 1, dim)
        out = emb.astype(cd) * scale + pe_sel.astype(cd)
        return out.astype(emb.dtype)

    # --- Pallas streaming path ------------------------------------------------
    # View (seq, batch, dim) as (seq, batch*dim): free bitcast; sublane dim = seq
    # tile (dense), lane dim = batch*dim (unmasked stores when dim % 128 == 0).
    emb2 = emb.reshape(seq_len, batch * dim)
    pe2 = pe[:seq_len, 0, :]                        # (seq, dim); no padded size-1 dim

    itemsize = jnp.dtype(emb.dtype).itemsize
    pe_itemsize = jnp.dtype(pe.dtype).itemsize
    pack = _sublane_pack(emb.dtype)

    # VMEM-*padded* bytes per sequence position for the double-buffered live set:
    # 2x emb-in tile + 2x out tile + 2x pe tile.
    row_eo = _round_up(batch * dim, 128) * itemsize
    row_pe = _round_up(dim, 128) * pe_itemsize
    per_pos = 2 * (2 * row_eo + row_pe)

    ts = max(1, vmem_budget_bytes // per_pos)
    # Keep >= 4 grid steps while tiles stay >= ~1 MiB: each v7x TensorCore gets
    # >= 2 pipelined steps; negligible cost on 1-TC parts since tiles stay big.
    cap = pl.cdiv(seq_len, 4)
    if cap * row_eo >= (1 << 20):
        ts = min(ts, cap)
    ts = min(ts, seq_len)
    if ts < seq_len:              # block sublane dim must be pack-aligned or full
        ts = max(pack, (ts // pack) * pack)
        ts = min(ts, seq_len)
    ts = int(ts)
    grid = (pl.cdiv(seq_len, ts),)

    live_bytes = ts * per_pos
    vmem_limit = int(min(64 * 1024 * 1024,
                         max(32 * 1024 * 1024, live_bytes + 8 * 1024 * 1024)))

    kernel = functools.partial(_pe_add_kernel, scale=scale, batch=batch,
                               dim=dim, compute_dtype=cd)

    out2 = pl.pallas_call(
        kernel,
        out_shape=jax.ShapeDtypeStruct((seq_len, batch * dim), emb.dtype),
        grid_spec=pltpu.PrefetchScalarGridSpec(
            num_scalar_prefetch=0,
            grid=grid,
            in_specs=[
                pl.BlockSpec((ts, batch * dim), lambda s: (s, 0)),
                pl.BlockSpec((ts, dim), lambda s: (s, 0)),
            ],
            out_specs=pl.BlockSpec((ts, batch * dim), lambda s: (s, 0)),
        ),
        input_output_aliases=({0: 0} if donate_emb else {}),
        compiler_params=pltpu.CompilerParams(
            dimension_semantics=("parallel",),
            vmem_limit_bytes=vmem_limit,
        ),
    )(emb2, pe2)
    return out2.reshape(seq_len, batch, dim)


if __name__ == "__main__":
    key = jax.random.PRNGKey(0)

    # 1) Main check: small but lane-dense (dim multiple of 128); force Pallas path.
    seq_len, batch, dim = 8, 2, 128
    max_len = 64
    emb = jax.random.normal(key, (seq_len, batch, dim), dtype=jnp.float32)
    pe = make_pe_table(dim, max_len=max_len)

    out = jax.block_until_ready(positional_encoding_forward(emb, pe, use_pallas=True))
    ref = emb * math.sqrt(dim) + pe[:seq_len]
    assert jnp.allclose(out, ref, atol=1e-5), "mismatch vs reference (seq path)"

    # 2) Stepwise decode path: plain-JAX fast path (per perf review).
    out_step = jax.block_until_ready(positional_encoding_forward(emb[:1], pe, step=3))
    ref_step = emb[:1] * math.sqrt(dim) + pe[3]
    assert jnp.allclose(out_step, ref_step, atol=1e-5), "mismatch vs reference (step path)"

    # 3) Small dim (not a multiple of 128): still correct, just not lane-dense.
    dim2 = 32
    emb2 = jax.random.normal(jax.random.PRNGKey(1), (seq_len, batch, dim2),
                             dtype=jnp.float32)
    pe2 = make_pe_table(dim2, max_len=max_len)
    out2 = jax.block_until_ready(positional_encoding_forward(emb2, pe2, use_pallas=True))
    ref2 = emb2 * math.sqrt(dim2) + pe2[:seq_len]
    assert jnp.allclose(out2, ref2, atol=1e-5), "mismatch vs reference (small dim)"

    # 4) Multi-block tiling path: small VMEM budget forces several grid steps.
    seq3, batch3, dim3 = 64, 8, 128
    emb3 = jax.random.normal(jax.random.PRNGKey(2), (seq3, batch3, dim3),
                             dtype=jnp.float32)
    pe3 = make_pe_table(dim3, max_len=128)
    out3 = jax.block_until_ready(
        positional_encoding_forward(emb3, pe3, use_pallas=True,
                                    vmem_budget_bytes=256 * 1024))
    ref3 = emb3 * math.sqrt(dim3) + pe3[:seq3]
    assert jnp.allclose(out3, ref3, atol=1e-5), "mismatch vs reference (tiled path)"

    print("KERNEL_OK")
</pallas_src>

<mosaic_0001>
module attributes {stable_mosaic.version = 11 : i64} {
  func.func @_pe_add_kernel(%arg0: i32, %arg1: memref<8x256xf32, #tpu.memory_space<vmem>>, %arg2: memref<8x128xf32, #tpu.memory_space<vmem>>, %arg3: memref<8x256xf32, #tpu.memory_space<vmem>>) attributes {dimension_semantics = [#tpu.dimension_semantics<parallel>], iteration_bounds = array<i64: 1>, scalar_prefetch = 0 : i64, scratch_operands = 0 : i64, tpu.core_type = #tpu.core_type<tc>, window_params = [{transform_indices = @transform_0, window_bounds = array<i64: 8, 256>}, {transform_indices = @transform_1, window_bounds = array<i64: 8, 128>}, {transform_indices = @transform_2, window_bounds = array<i64: 8, 256>}]} {
    %c0 = arith.constant 0 : index
    %c0_0 = arith.constant 0 : index
    %0 = vector.load %arg2[%c0, %c0_0] : memref<8x128xf32, #tpu.memory_space<vmem>>, vector<8x128xf32>
    %c0_1 = arith.constant 0 : index
    %c0_2 = arith.constant 0 : index
    %1 = vector.load %arg1[%c0_1, %c0_2] : memref<8x256xf32, #tpu.memory_space<vmem>>, vector<8x128xf32>
    %cst = arith.constant 11.3137083 : f32
    %2 = vector.broadcast %cst : f32 to vector<8x128xf32>
    %3 = arith.mulf %1, %2 : vector<8x128xf32>
    %4 = arith.addf %3, %0 : vector<8x128xf32>
    %c0_3 = arith.constant 0 : index
    %c0_4 = arith.constant 0 : index
    %5 = vector.load %arg3[%c0_3, %c0_4] : memref<8x256xf32, #tpu.memory_space<vmem>>, vector<8x128xf32>
    tpu.vector_store %arg3[%c0_3, %c0_4], %4 {strides = array<i32>} : memref<8x256xf32, #tpu.memory_space<vmem>>, vector<8x128xf32>,
    %c0_5 = arith.constant 0 : index
    %c128 = arith.constant 128 : index
    %6 = vector.load %arg1[%c0_5, %c128] : memref<8x256xf32, #tpu.memory_space<vmem>>, vector<8x128xf32>
    %cst_6 = arith.constant 11.3137083 : f32
    %7 = vector.broadcast %cst_6 : f32 to vector<8x128xf32>
    %8 = arith.mulf %6, %7 : vector<8x128xf32>
    %9 = arith.addf %8, %0 : vector<8x128xf32>
    %c0_7 = arith.constant 0 : index
    %c128_8 = arith.constant 128 : index
    %10 = vector.load %arg3[%c0_7, %c128_8] : memref<8x256xf32, #tpu.memory_space<vmem>>, vector<8x128xf32>
    tpu.vector_store %arg3[%c0_7, %c128_8], %9 {strides = array<i32>} : memref<8x256xf32, #tpu.memory_space<vmem>>, vector<8x128xf32>,
    return
  }
  func.func @transform_0(%arg0: i32) -> (i32, i32) {
    %c0_i32 = arith.constant 0 : i32
    %c0_i32_0 = arith.constant 0 : i32
    return %arg0, %c0_i32 : i32, i32
  }
  func.func @transform_1(%arg0: i32) -> (i32, i32) {
    %c0_i32 = arith.constant 0 : i32
    %c0_i32_0 = arith.constant 0 : i32
    return %arg0, %c0_i32 : i32, i32
  }
  func.func @transform_2(%arg0: i32) -> (i32, i32) {
    %c0_i32 = arith.constant 0 : i32
    %c0_i32_0 = arith.constant 0 : i32
    return %arg0, %c0_i32 : i32, i32
  }
}

</mosaic_0001>

<llo_original>
// kernel: tpu_custom_call.1
$region0: #{tpu_custom_call.1}
  #allocation0 [shape = 'u32[]', space=smem, size = 0x4, offset = 0x4, fixed_abs, tag = 'smem constant byte address 0x4 - core index']
  #allocation1 [shape = 'u32[72,128]{1,0:T(1,128)}', space=vmem, size = 0x9000, scoped, tag = 'internal scratch']
  %s0 = inlined_call_operand.hbm [shape: f32[8,256], index: 0, kind: input, shape index: {}]
  %s1 = inlined_call_operand.hbm [shape: f32[8,128], index: 1, kind: input, shape index: {}]
  %s2 = inlined_call_operand.hbm [shape: f32[8,256], index: 2, kind: output, shape index: {}]
  %s3 = sld [smem:[#allocation0]]
  $region26: #{tpu_custom_call.1} parent=0
    _
  %s5 = ssub.s32 1, %s3
  %s6 = scalar_select 0, %s5, %s3
  $region1: #{tpu_custom_call.1} parent=0
    #allocation2 [shape = 'u8[8192]{0}', space=vmem, size = 0x2000, scoped, tag = 'input window, operand 0, single buffered']
    #allocation3 [shape = 's32[1]{0}', space=sflag, size = 0x4, scoped, tag = 'scoped memory for tpu_custom_call.1']
    #allocation4 [shape = 's32[1]{0}', space=sflag, size = 0x4, scoped, tag = 'scoped memory for tpu_custom_call.1']
    #allocation5 [shape = 'u8[4096]{0}', space=vmem, size = 0x1000, scoped, tag = 'input window, operand 1, single buffered']
    #allocation6 [shape = 's32[1]{0}', space=sflag, size = 0x4, scoped, tag = 'scoped memory for tpu_custom_call.1']
    #allocation7 [shape = 'u8[8192]{0}', space=vmem, size = 0x2000, scoped, tag = 'output window, operand 0, single buffered']
    %7 = vsyncpa [#allocation3], 0
    %8 = vsyncpa [#allocation6], 0
    %9 = vsyncpa [#allocation4], 0
    // Predicated region
    $region2: #{tpu_custom_call.1} parent=1 // pred_check
      _
    $region3: #{tpu_custom_call.1} parent=1 // pred_check_branch
      %11 = sbr.rel (0) target = $region5
    $region4: #{tpu_custom_call.1} parent=1 // pred_region
      %13 = vsyncadd [#allocation3], 0
      %s15 = sshll.u32 %s0, 4
      %s16 = int_to_ptr.hbm [resolvable:$true] %s15
      %s17 = sshll.u32 [#allocation2], 4
      %s18 = int_to_ptr.vmem [resolvable:$true] %s17
      %20 = dma.hbm_to_vmem [thread:$0]  %s16, 256, %s18, [#allocation3]
    $region5: #{tpu_custom_call.1} parent=1 // pred_fallthru
      _
    // Predicated region
    $region6: #{tpu_custom_call.1} parent=1 // pred_check
      _
    $region7: #{tpu_custom_call.1} parent=1 // pred_check_branch
      %22 = sbr.rel (0) target = $region9
    $region8: #{tpu_custom_call.1} parent=1 // pred_region
      %24 = vsyncadd [#allocation6], 0
      %s26 = sshll.u32 %s1, 4
      %s27 = int_to_ptr.hbm [resolvable:$true] %s26
      %s28 = sshll.u32 [#allocation5], 4
      %s29 = int_to_ptr.vmem [resolvable:$true] %s28
      %31 = dma.hbm_to_vmem [thread:$0]  %s27, 128, %s29, [#allocation6]
    $region9: #{tpu_custom_call.1} parent=1 // pred_fallthru
      _
    // Predicated region
    $region10: #{tpu_custom_call.1} parent=1 // pred_check
      _
    $region11: #{tpu_custom_call.1} parent=1 // pred_check_branch
      %33 = sbr.rel (0) target = $region13
    $region12: #{tpu_custom_call.1} parent=1 // pred_region
      %35 = dma.done [#allocation3], 256
    $region13: #{tpu_custom_call.1} parent=1 // pred_fallthru
      _
    // Predicated region
    $region14: #{tpu_custom_call.1} parent=1 // pred_check
      _
    $region15: #{tpu_custom_call.1} parent=1 // pred_check_branch
      %37 = sbr.rel (0) target = $region17
    $region16: #{tpu_custom_call.1} parent=1 // pred_region
      %39 = dma.done [#allocation6], 128
    $region17: #{tpu_custom_call.1} parent=1 // pred_fallthru
      _
    %v40 = vld [vmem:[#allocation5] sm:$0xff]
    %v41 = vld [vmem:[#allocation2] sm:$0xff]
    %v42 = vmul.f32 %v41, 11.313708
    %v43 = vadd.f32 %v42, %v40
    %44 = vst [vmem:[#allocation7] sm:$0xff] %v43
    %v45 = vld [vmem:[#allocation2 + $0x8] sm:$0xff]
    %v46 = vmul.f32 %v45, 11.313708
    %v47 = vadd.f32 %v46, %v40
    %48 = vst [vmem:[#allocation7 + $0x8] sm:$0xff] %v47
    // Predicated region
    $region18: #{tpu_custom_call.1} parent=1 // pred_check
      _
    $region19: #{tpu_custom_call.1} parent=1 // pred_check_branch
      %50 = sbr.rel (0) target = $region21
    $region20: #{tpu_custom_call.1} parent=1 // pred_region
      %52 = vsyncadd [#allocation4], 0
      %s54 = sshll.u32 [#allocation7], 4
      %s55 = int_to_ptr.vmem [resolvable:$true] %s54
      %s56 = sshll.u32 %s2, 4
      %s57 = int_to_ptr.hbm [resolvable:$true] %s56
      %59 = dma.vmem_to_hbm [thread:$0]  %s55, 256, %s57, [#allocation4]
    $region21: #{tpu_custom_call.1} parent=1 // pred_fallthru
      _
    // Predicated region
    $region22: #{tpu_custom_call.1} parent=1 // pred_check
      _
    $region23: #{tpu_custom_call.1} parent=1 // pred_check_branch
      %61 = sbr.rel (0) target = $region25
    $region24: #{tpu_custom_call.1} parent=1 // pred_region
      %63 = dma.done [#allocation4], 256
    $region25: #{tpu_custom_call.1} parent=1 // pred_fallthru
      _
    %64 = vsyncpa [#allocation3], 1
    %65 = vsyncpa [#allocation6], 1
    %66 = vsyncpa [#allocation4], 1

</llo_original>
